<compile_context>
chip_gen: v7x
topology: tpu7x:2x2x1
jax: 0.10.0
libtpu: 0.0.40
codegen_flags: <defaults>
</compile_context>

<pallas_src>
import jax
import jax.numpy as jnp
from jax.experimental import pallas as pl
from jax.experimental.pallas import tpu as pltpu


def _tpu_generation_params():
    """Block-size budget / VMEM limit / parallel-core count per TPU generation."""
    try:
        kind = jax.devices()[0].device_kind.lower()
    except Exception:
        kind = ""
    if "v7" in kind:
        # v7x: 64 MiB physical VMEM per core, 2 TensorCores per chip.
        return {"target_bytes": 8 << 20, "vmem_limit": 32 * 1024 * 1024,
                "parallel_cores": 2}
    if "v5" in kind or "v6" in kind:
        # v5e/v5p/v6e: 128 MiB physical VMEM, 1 TensorCore.
        return {"target_bytes": 16 << 20, "vmem_limit": 64 * 1024 * 1024,
                "parallel_cores": 1}
    # Unknown generation: conservative but still big-block.
    return {"target_bytes": 8 << 20, "vmem_limit": 32 * 1024 * 1024,
            "parallel_cores": 1}


def _pick_tiles(N, C, HW_pad, itemsize, target_bytes, min_batch_blocks):
    """Choose (batch block, spatial chunk).

    Grows the spatial chunk first (preferring the full extent) so each input block
    approaches `target_bytes`, then packs batch elements into the remaining budget
    while keeping at least `min_batch_blocks` grid points on the parallel axis.
    """
    row_bytes = C * itemsize
    if HW_pad * row_bytes <= target_bytes or HW_pad % 128 != 0:
        # Full spatial extent in one chunk (misaligned HW only reaches here when
        # the wrapper has verified it fits the budget).
        hw_chunk = HW_pad
    else:
        m = HW_pad // 128
        budget_k = max(1, target_bytes // (128 * row_bytes))
        best = 1
        for k in range(1, m + 1):
            if m % k == 0 and k <= budget_k:
                best = k
        hw_chunk = 128 * best

    blk_bytes = hw_chunk * row_bytes
    bn_cap = min(N,
                 max(1, target_bytes // max(1, blk_bytes)),
                 max(1, N // max(1, min_batch_blocks)))
    bn = 1
    for cand in range(bn_cap, 0, -1):
        if N % cand == 0:
            bn = cand
            break
    return bn, hw_chunk


def ca_forward(x, fc1_w, fc2_w, *, bn=None, hw_chunk=None, target_bytes=None):
    """Channel-attention forward.

    x:      (N, C, H, W)
    fc1_w:  (Cr, C, 1, 1)   PyTorch Conv2d weight (no bias), Cr = C // ratio
    fc2_w:  (C, Cr, 1, 1)
    returns (N, C, 1, 1) = sigmoid(fc2(relu(fc1(avgpool(x)))) + fc2(relu(fc1(maxpool(x)))))
    """
    N, C, H, W = x.shape
    HW = H * W
    Cr = fc1_w.shape[0]
    assert fc1_w.shape == (Cr, C, 1, 1) and fc2_w.shape == (C, Cr, 1, 1)

    params = _tpu_generation_params()
    tb = params["target_bytes"] if target_bytes is None else target_bytes
    itemsize = x.dtype.itemsize

    x3 = x.reshape(N, C, HW)            # lane-dense view; no data movement

    # Pad the spatial axis to a multiple of 128 only when it is misaligned AND too
    # big to load as one full-extent chunk: small cases stay copy-free, large ones
    # keep 128-lane streaming (no single-block VMEM blowup on v7x).
    if HW % 128 != 0 and C * HW * itemsize > tb:
        HW_pad = ((HW + 127) // 128) * 128
        x3 = jnp.pad(x3, ((0, 0), (0, 0), (0, HW_pad - HW)))
    else:
        HW_pad = HW
    padded = HW_pad != HW

    min_batch_blocks = 2 if (params["parallel_cores"] >= 2 and N >= 2) else 1
    # TODO(synk): for N == 1 on v7x, split the spatial range across a second
    # parallel grid axis with per-core partial max/sum accumulators so both
    # TensorCores pull HBM.

    auto_bn, auto_hw = _pick_tiles(N, C, HW_pad, itemsize, tb, min_batch_blocks)
    bn = auto_bn if bn is None else bn
    hw_chunk = auto_hw if hw_chunk is None else hw_chunk
    assert N % bn == 0 and HW_pad % hw_chunk == 0
    assert hw_chunk == HW_pad or hw_chunk % 128 == 0

    w1t = fc1_w.reshape(Cr, C).T        # (C, Cr)  -> plain row-major matmul
    w2t = fc2_w.reshape(C, Cr).T        # (Cr, C)

    n_s = HW_pad // hw_chunk
    inv_hw = 1.0 / float(HW)            # true spatial size (padding is zeros)
    if jnp.issubdtype(x.dtype, jnp.floating):
        neg_fill = float("-inf")
    else:
        neg_fill = int(jnp.iinfo(x.dtype).min)

    def kernel(x_ref, w1t_ref, w2t_ref, o_ref, max_acc, sum_acc):
        s = pl.program_id(1)

        xb = x_ref[...]                                     # (bn, C, hw_chunk), native dtype
        if padded:
            lane = jax.lax.broadcasted_iota(jnp.int32, xb.shape, 2)
            valid = (s * hw_chunk + lane) < HW
            x_for_max = jnp.where(valid, xb, jnp.asarray(neg_fill, xb.dtype))
        else:
            x_for_max = xb
        # Max in the native dtype; only the sum path is widened to f32.
        blk_max = jnp.max(x_for_max, axis=2).astype(jnp.float32)   # (bn, C)
        blk_sum = jnp.sum(xb.astype(jnp.float32), axis=2)          # (bn, C)

        @pl.when(s == 0)
        def _():
            max_acc[...] = blk_max
            sum_acc[...] = blk_sum

        @pl.when(s != 0)
        def _():
            max_acc[...] = jnp.maximum(max_acc[...], blk_max)
            sum_acc[...] = sum_acc[...] + blk_sum

        @pl.when(s == pl.num_programs(1) - 1)
        def _():
            w1t_m = w1t_ref[...].astype(jnp.float32)        # (C, Cr)
            w2t_m = w2t_ref[...].astype(jnp.float32)        # (Cr, C)
            avg = sum_acc[...] * inv_hw                     # (bn, C)
            mx = max_acc[...]                               # (bn, C)
            ya = jnp.dot(
                jnp.maximum(jnp.dot(avg, w1t_m, preferred_element_type=jnp.float32), 0.0),
                w2t_m, preferred_element_type=jnp.float32)
            ym = jnp.dot(
                jnp.maximum(jnp.dot(mx, w1t_m, preferred_element_type=jnp.float32), 0.0),
                w2t_m, preferred_element_type=jnp.float32)
            o_ref[...] = jax.nn.sigmoid(ya + ym).astype(o_ref.dtype)

    out = pl.pallas_call(
        kernel,
        out_shape=jax.ShapeDtypeStruct((N, C), x.dtype),       # lane-dense output
        grid_spec=pltpu.PrefetchScalarGridSpec(
            num_scalar_prefetch=0,
            grid=(N // bn, n_s),
            in_specs=[
                pl.BlockSpec((bn, C, hw_chunk), lambda b, s: (b, 0, s)),
                pl.BlockSpec((C, Cr), lambda b, s: (0, 0)),
                pl.BlockSpec((Cr, C), lambda b, s: (0, 0)),
            ],
            out_specs=pl.BlockSpec((bn, C), lambda b, s: (b, 0)),
            scratch_shapes=[
                pltpu.VMEM((bn, C), jnp.float32),   # running max
                pltpu.VMEM((bn, C), jnp.float32),   # running sum
            ],
        ),
        compiler_params=pltpu.CompilerParams(
            dimension_semantics=("parallel", "arbitrary"),
            vmem_limit_bytes=params["vmem_limit"],
        ),
    )(x3, w1t, w2t)

    return out.reshape(N, C, 1, 1)


def ca_reference(x, fc1_w, fc2_w):
    N, C, H, W = x.shape
    Cr = fc1_w.shape[0]
    w1 = fc1_w.reshape(Cr, C).astype(jnp.float32)
    w2 = fc2_w.reshape(C, Cr).astype(jnp.float32)
    xf = x.astype(jnp.float32)
    avg = jnp.mean(xf, axis=(2, 3))      # (N, C)
    mx = jnp.max(xf, axis=(2, 3))        # (N, C)

    def branch(v):
        return jnp.maximum(v @ w1.T, 0.0) @ w2.T

    return jax.nn.sigmoid(branch(avg) + branch(mx)).reshape(N, C, 1, 1)


if __name__ == "__main__":
    key = jax.random.PRNGKey(0)
    kx, k1, k2 = jax.random.split(key, 3)

    # in_planes=64 with the module's default ratio=16 -> hidden Cr=4
    N, C, H, W = 2, 64, 16, 16
    ratio = 16
    Cr = C // ratio

    x = jax.random.normal(kx, (N, C, H, W), dtype=jnp.float32)
    fc1_w = jax.random.normal(k1, (Cr, C, 1, 1), dtype=jnp.float32) * 0.1
    fc2_w = jax.random.normal(k2, (C, Cr, 1, 1), dtype=jnp.float32) * 0.1

    ref = ca_reference(x, fc1_w, fc2_w)

    # Auto-tiled path (full spatial chunk, batch packed per step subject to the
    # >=2 parallel-blocks rule on multi-core parts).
    out = jax.block_until_ready(ca_forward(x, fc1_w, fc2_w))
    assert out.shape == (N, C, 1, 1)
    assert jnp.allclose(out, ref, atol=1e-5, rtol=1e-5)

    # Explicitly chunked path (exercises streaming max/sum accumulation and the
    # bn=1 lane-dense output block).
    out2 = jax.block_until_ready(ca_forward(x, fc1_w, fc2_w, bn=1, hw_chunk=128))
    assert jnp.allclose(out2, ref, atol=1e-5, rtol=1e-5)

    # Padded path: HW = 400 (not a multiple of 128) with a tiny block budget forces
    # wrapper-side zero padding; all-negative inputs verify the masked max.
    xp = -jnp.abs(jax.random.normal(kx, (N, C, 20, 20), dtype=jnp.float32)) - 0.1
    refp = ca_reference(xp, fc1_w, fc2_w)
    outp = jax.block_until_ready(ca_forward(xp, fc1_w, fc2_w, target_bytes=64 * 1024))
    assert jnp.allclose(outp, refp, atol=1e-5, rtol=1e-5)

    # bf16 input path (native-dtype max, f32 sum accumulation).
    xb = x.astype(jnp.bfloat16)
    refb = ca_reference(xb, fc1_w, fc2_w)
    outb = jax.block_until_ready(ca_forward(xb, fc1_w, fc2_w))
    assert jnp.allclose(outb.astype(jnp.float32), refb, atol=2e-2, rtol=2e-2)

    print("KERNEL_OK")
</pallas_src>

<mosaic_0001>
module attributes {stable_mosaic.version = 11 : i64} {
  func.func @kernel(%arg0: i32, %arg1: i32, %arg2: memref<2x64x256xf32, #tpu.memory_space<vmem>>, %arg3: memref<64x4xf32, #tpu.memory_space<vmem>>, %arg4: memref<4x64xf32, #tpu.memory_space<vmem>>, %arg5: memref<2x64xf32, #tpu.memory_space<vmem>>, %arg6: memref<2x64xf32, #tpu.memory_space<vmem>>, %arg7: memref<2x64xf32, #tpu.memory_space<vmem>>) attributes {dimension_semantics = [#tpu.dimension_semantics<parallel>, #tpu.dimension_semantics<arbitrary>], iteration_bounds = array<i64: 1, 1>, scalar_prefetch = 0 : i64, scratch_operands = 2 : i64, tpu.core_type = #tpu.core_type<tc>, window_params = [{transform_indices = @transform_0, window_bounds = array<i64: 2, 64, 256>}, {pipeline_mode = #tpu.pipeline_mode<synchronous>, transform_indices = @transform_1, window_bounds = array<i64: 64, 4>}, {pipeline_mode = #tpu.pipeline_mode<synchronous>, transform_indices = @transform_2, window_bounds = array<i64: 4, 64>}, {transform_indices = @transform_3, window_bounds = array<i64: 2, 64>}]} {
    %c0 = arith.constant 0 : index
    %c0_0 = arith.constant 0 : index
    %c0_1 = arith.constant 0 : index
    %0 = vector.load %arg2[%c0, %c0_0, %c0_1] : memref<2x64x256xf32, #tpu.memory_space<vmem>>, vector<2x64x256xf32>
    %cst = arith.constant dense<0xFF800000> : vector<2x64xf32>
    %1 = vector.multi_reduction <maximumf>, %0, %cst [2] : vector<2x64x256xf32> to vector<2x64xf32>
    %cst_2 = arith.constant dense<0.000000e+00> : vector<2x64xf32>
    %2 = vector.multi_reduction <add>, %0, %cst_2 [2] : vector<2x64x256xf32> to vector<2x64xf32>
    %c0_i32 = arith.constant 0 : i32
    %3 = arith.cmpi eq, %arg1, %c0_i32 : i32
    %4 = arith.extui %3 : i1 to i32
    %c0_i32_3 = arith.constant 0 : i32
    %5 = arith.cmpi ne, %4, %c0_i32_3 : i32
    scf.if %5 {
      %c0_8 = arith.constant 0 : index
      %c0_9 = arith.constant 0 : index
      %12 = vector.load %arg6[%c0_8, %c0_9] : memref<2x64xf32, #tpu.memory_space<vmem>>, vector<2x64xf32>
      tpu.vector_store %arg6[%c0_8, %c0_9], %1 {strides = array<i32>} : memref<2x64xf32, #tpu.memory_space<vmem>>, vector<2x64xf32>,
      %c0_10 = arith.constant 0 : index
      %c0_11 = arith.constant 0 : index
      %13 = vector.load %arg7[%c0_10, %c0_11] : memref<2x64xf32, #tpu.memory_space<vmem>>, vector<2x64xf32>
      tpu.vector_store %arg7[%c0_10, %c0_11], %2 {strides = array<i32>} : memref<2x64xf32, #tpu.memory_space<vmem>>, vector<2x64xf32>,
    } else {
    }
    %c0_i32_4 = arith.constant 0 : i32
    %6 = arith.cmpi ne, %arg1, %c0_i32_4 : i32
    %7 = arith.extui %6 : i1 to i32
    %c0_i32_5 = arith.constant 0 : i32
    %8 = arith.cmpi ne, %7, %c0_i32_5 : i32
    scf.if %8 {
      %c0_8 = arith.constant 0 : index
      %c0_9 = arith.constant 0 : index
      %12 = vector.load %arg6[%c0_8, %c0_9] : memref<2x64xf32, #tpu.memory_space<vmem>>, vector<2x64xf32>
      %13 = arith.maximumf %12, %1 : vector<2x64xf32>
      %c0_10 = arith.constant 0 : index
      %c0_11 = arith.constant 0 : index
      %14 = vector.load %arg6[%c0_10, %c0_11] : memref<2x64xf32, #tpu.memory_space<vmem>>, vector<2x64xf32>
      tpu.vector_store %arg6[%c0_10, %c0_11], %13 {strides = array<i32>} : memref<2x64xf32, #tpu.memory_space<vmem>>, vector<2x64xf32>,
      %c0_12 = arith.constant 0 : index
      %c0_13 = arith.constant 0 : index
      %15 = vector.load %arg7[%c0_12, %c0_13] : memref<2x64xf32, #tpu.memory_space<vmem>>, vector<2x64xf32>
      %16 = arith.addf %15, %2 : vector<2x64xf32>
      %c0_14 = arith.constant 0 : index
      %c0_15 = arith.constant 0 : index
      %17 = vector.load %arg7[%c0_14, %c0_15] : memref<2x64xf32, #tpu.memory_space<vmem>>, vector<2x64xf32>
      tpu.vector_store %arg7[%c0_14, %c0_15], %16 {strides = array<i32>} : memref<2x64xf32, #tpu.memory_space<vmem>>, vector<2x64xf32>,
    } else {
    }
    %c0_i32_6 = arith.constant 0 : i32
    %9 = arith.cmpi eq, %arg1, %c0_i32_6 : i32
    %10 = arith.extui %9 : i1 to i32
    %c0_i32_7 = arith.constant 0 : i32
    %11 = arith.cmpi ne, %10, %c0_i32_7 : i32
    scf.if %11 {
      %c0_8 = arith.constant 0 : index
      %c0_9 = arith.constant 0 : index
      %12 = vector.load %arg3[%c0_8, %c0_9] : memref<64x4xf32, #tpu.memory_space<vmem>>, vector<64x4xf32>
      %c0_10 = arith.constant 0 : index
      %c0_11 = arith.constant 0 : index
      %13 = vector.load %arg4[%c0_10, %c0_11] : memref<4x64xf32, #tpu.memory_space<vmem>>, vector<4x64xf32>
      %c0_12 = arith.constant 0 : index
      %c0_13 = arith.constant 0 : index
      %14 = vector.load %arg7[%c0_12, %c0_13] : memref<2x64xf32, #tpu.memory_space<vmem>>, vector<2x64xf32>
      %cst_14 = arith.constant 3.906250e-03 : f32
      %15 = vector.broadcast %cst_14 : f32 to vector<2x64xf32>
      %16 = arith.mulf %14, %15 : vector<2x64xf32>
      %c0_15 = arith.constant 0 : index
      %c0_16 = arith.constant 0 : index
      %17 = vector.load %arg6[%c0_15, %c0_16] : memref<2x64xf32, #tpu.memory_space<vmem>>, vector<2x64xf32>
      %cst_17 = arith.constant dense<0.000000e+00> : vector<2x4xf32>
      %18 = tpu.matmul %16, %12, %cst_17 {dimension_numbers = #tpu.dot_dimension_numbers<[1], [0], [0], [1], [0, 0, 1, 1], [], []>} : vector<2x64xf32>, vector<64x4xf32>, vector<2x4xf32> -> vector<2x4xf32>
      %cst_18 = arith.constant 0.000000e+00 : f32
      %19 = vector.broadcast %cst_18 : f32 to vector<2x4xf32>
      %20 = arith.maximumf %18, %19 : vector<2x4xf32>
      %cst_19 = arith.constant dense<0.000000e+00> : vector<2x64xf32>
      %21 = tpu.matmul %20, %13, %cst_19 {dimension_numbers = #tpu.dot_dimension_numbers<[1], [0], [0], [1], [0, 0, 1, 1], [], []>} : vector<2x4xf32>, vector<4x64xf32>, vector<2x64xf32> -> vector<2x64xf32>
      %cst_20 = arith.constant dense<0.000000e+00> : vector<2x4xf32>
      %22 = tpu.matmul %17, %12, %cst_20 {dimension_numbers = #tpu.dot_dimension_numbers<[1], [0], [0], [1], [0, 0, 1, 1], [], []>} : vector<2x64xf32>, vector<64x4xf32>, vector<2x4xf32> -> vector<2x4xf32>
      %cst_21 = arith.constant 0.000000e+00 : f32
      %23 = vector.broadcast %cst_21 : f32 to vector<2x4xf32>
      %24 = arith.maximumf %22, %23 : vector<2x4xf32>
      %cst_22 = arith.constant dense<0.000000e+00> : vector<2x64xf32>
      %25 = tpu.matmul %24, %13, %cst_22 {dimension_numbers = #tpu.dot_dimension_numbers<[1], [0], [0], [1], [0, 0, 1, 1], [], []>} : vector<2x4xf32>, vector<4x64xf32>, vector<2x64xf32> -> vector<2x64xf32>
      %26 = arith.addf %21, %25 : vector<2x64xf32>
      %27 = arith.negf %26 : vector<2x64xf32>
      %28 = math.exp %27 : vector<2x64xf32>
      %cst_23 = arith.constant 1.000000e+00 : f32
      %29 = vector.broadcast %cst_23 : f32 to vector<2x64xf32>
      %30 = arith.addf %29, %28 : vector<2x64xf32>
      %31 = arith.divf %29, %30 : vector<2x64xf32>
      %c0_24 = arith.constant 0 : index
      %c0_25 = arith.constant 0 : index
      %32 = vector.load %arg5[%c0_24, %c0_25] : memref<2x64xf32, #tpu.memory_space<vmem>>, vector<2x64xf32>
      tpu.vector_store %arg5[%c0_24, %c0_25], %31 {strides = array<i32>} : memref<2x64xf32, #tpu.memory_space<vmem>>, vector<2x64xf32>,
    } else {
    }
    return
  }
  func.func @transform_0(%arg0: i32, %arg1: i32) -> (i32, i32, i32) {
    %c0_i32 = arith.constant 0 : i32
    %c0_i32_0 = arith.constant 0 : i32
    return %arg0, %c0_i32, %arg1 : i32, i32, i32
  }
  func.func @transform_1(%arg0: i32, %arg1: i32) -> (i32, i32) {
    %c0_i32 = arith.constant 0 : i32
    %c0_i32_0 = arith.constant 0 : i32
    %c0_i32_1 = arith.constant 0 : i32
    return %c0_i32, %c0_i32_0 : i32, i32
  }
  func.func @transform_2(%arg0: i32, %arg1: i32) -> (i32, i32) {
    %c0_i32 = arith.constant 0 : i32
    %c0_i32_0 = arith.constant 0 : i32
    %c0_i32_1 = arith.constant 0 : i32
    return %c0_i32, %c0_i32_0 : i32, i32
  }
  func.func @transform_3(%arg0: i32, %arg1: i32) -> (i32, i32) {
    %c0_i32 = arith.constant 0 : i32
    %c0_i32_0 = arith.constant 0 : i32
    return %arg0, %c0_i32 : i32, i32
  }
}

</mosaic_0001>

<llo_original>
// kernel: tpu_custom_call.1
$region0: #{tpu_custom_call.1}
  #allocation0 [shape = 'u32[]', space=smem, size = 0x4, offset = 0x4, fixed_abs, tag = 'smem constant byte address 0x4 - core index']
  #allocation1 [shape = 'u32[144,128]{1,0:T(1,128)}', space=vmem, size = 0x12000, scoped, tag = 'internal scratch']
  #allocation2 [shape = 'f32[2,64]{1,0:T(2,128)}', space=vmem, size = 0x400, scoped, tag = 'scratch operand']
  #allocation3 [shape = 'f32[2,64]{1,0:T(2,128)}', space=vmem, size = 0x400, scoped, tag = 'scratch operand']
  %s0 = inlined_call_operand.hbm [shape: f32[2,64,256], index: 0, kind: input, shape index: {}]
  %s1 = inlined_call_operand.vmem [shape: f32[64,4], index: 1, kind: input, shape index: {}]
  %s2 = inlined_call_operand.vmem [shape: f32[4,64], index: 2, kind: input, shape index: {}]
  %s3 = inlined_call_operand.hbm [shape: f32[2,64], index: 3, kind: output, shape index: {}]
  %s4 = sld [smem:[#allocation0]]
  $region38: #{tpu_custom_call.1} parent=0
    _
  %s6 = ssub.s32 1, %s4
  %s7 = scalar_select 0, %s6, %s4
  $region1: #{tpu_custom_call.1} parent=0
    #allocation4 [shape = 'u8[131072]{0}', space=vmem, size = 0x20000, scoped, tag = 'input window, operand 0, single buffered']
    #allocation5 [shape = 's32[1]{0}', space=sflag, size = 0x4, scoped, tag = 'scoped memory for tpu_custom_call.1']
    #allocation6 [shape = 's32[1]{0}', space=sflag, size = 0x4, scoped, tag = 'scoped memory for tpu_custom_call.1']
    #allocation7 [shape = 'u8[1024]{0}', space=vmem, size = 0x400, scoped, tag = 'output window, operand 0, single buffered']
    %8 = vsyncpa [#allocation5], 0
    %9 = vsyncpa [#allocation6], 0
    // Predicated region
    $region2: #{tpu_custom_call.1} parent=1 // pred_check
      _
    $region3: #{tpu_custom_call.1} parent=1 // pred_check_branch
      %11 = sbr.rel (0) target = $region5
    $region4: #{tpu_custom_call.1} parent=1 // pred_region
      %s13 = ssub.s32 4096, 4096
      %14 = vsyncadd [#allocation5], %s13
      %s15 = sshll.u32 [#allocation4], 4
      %s16 = int_to_ptr.vmem [resolvable:$true] %s15
      %21 = dma.hbm_to_vmem [thread:$0]  %s0, 4096, %s16, [#allocation5], 256, 256, 16
    $region5: #{tpu_custom_call.1} parent=1 // pred_fallthru
      _
    // Predicated region
    $region6: #{tpu_custom_call.1} parent=1 // pred_check
      _
    $region7: #{tpu_custom_call.1} parent=1 // pred_check_branch
      %23 = sbr.rel (0) target = $region9
    $region8: #{tpu_custom_call.1} parent=1 // pred_region
      _
    $region9: #{tpu_custom_call.1} parent=1 // pred_fallthru
      _
    // Predicated region
    $region10: #{tpu_custom_call.1} parent=1 // pred_check
      _
    $region11: #{tpu_custom_call.1} parent=1 // pred_check_branch
      %25 = sbr.rel (0) target = $region13
    $region12: #{tpu_custom_call.1} parent=1 // pred_region
      _
    $region13: #{tpu_custom_call.1} parent=1 // pred_fallthru
      _
    // Predicated region
    $region14: #{tpu_custom_call.1} parent=1 // pred_check
      _
    $region15: #{tpu_custom_call.1} parent=1 // pred_check_branch
      %27 = sbr.rel (0) target = $region17
    $region16: #{tpu_custom_call.1} parent=1 // pred_region
      %28 = dma.done [#allocation5], 4096
    $region17: #{tpu_custom_call.1} parent=1 // pred_fallthru
      _
    %v29 = vld [vmem:[#allocation4] sm:$0xff]
    %v30 = vld [vmem:[#allocation4 + $0x8] sm:$0xff]
    %v31 = vld [vmem:[#allocation4 + $0x10] sm:$0xff]
    %v32 = vld [vmem:[#allocation4 + $0x18] sm:$0xff]
    %v33 = vld [vmem:[#allocation4 + $0x20] sm:$0xff]
    %v34 = vld [vmem:[#allocation4 + $0x28] sm:$0xff]
    %v35 = vld [vmem:[#allocation4 + $0x30] sm:$0xff]
    %v36 = vld [vmem:[#allocation4 + $0x38] sm:$0xff]
    %v37 = vld [vmem:[#allocation4 + $0x40] sm:$0xff]
    %v38 = vld [vmem:[#allocation4 + $0x48] sm:$0xff]
    %v39 = vld [vmem:[#allocation4 + $0x50] sm:$0xff]
    %v40 = vld [vmem:[#allocation4 + $0x58] sm:$0xff]
    %v41 = vld [vmem:[#allocation4 + $0x60] sm:$0xff]
    %v42 = vld [vmem:[#allocation4 + $0x68] sm:$0xff]
    %v43 = vld [vmem:[#allocation4 + $0x70] sm:$0xff]
    %v44 = vld [vmem:[#allocation4 + $0x78] sm:$0xff]
    %v45 = vld [vmem:[#allocation4 + $0x80] sm:$0xff]
    %v46 = vld [vmem:[#allocation4 + $0x88] sm:$0xff]
    %v47 = vld [vmem:[#allocation4 + $0x90] sm:$0xff]
    %v48 = vld [vmem:[#allocation4 + $0x98] sm:$0xff]
    %v49 = vld [vmem:[#allocation4 + $0xa0] sm:$0xff]
    %v50 = vld [vmem:[#allocation4 + $0xa8] sm:$0xff]
    %v51 = vld [vmem:[#allocation4 + $0xb0] sm:$0xff]
    %v52 = vld [vmem:[#allocation4 + $0xb8] sm:$0xff]
    %v53 = vld [vmem:[#allocation4 + $0xc0] sm:$0xff]
    %v54 = vld [vmem:[#allocation4 + $0xc8] sm:$0xff]
    %v55 = vld [vmem:[#allocation4 + $0xd0] sm:$0xff]
    %v56 = vld [vmem:[#allocation4 + $0xd8] sm:$0xff]
    %v57 = vld [vmem:[#allocation4 + $0xe0] sm:$0xff]
    %v58 = vld [vmem:[#allocation4 + $0xe8] sm:$0xff]
    %v59 = vld [vmem:[#allocation4 + $0xf0] sm:$0xff]
    %v60 = vld [vmem:[#allocation4 + $0xf8] sm:$0xff]
    %v61 = vmax.f32 %v29, %v30
    %62 = vmax.xlane.f32.xlu0 %v61
    %v63 = vpop.xlane.xlu0 %62
    %v64 = vmax.f32 %v31, %v32
    %65 = vmax.xlane.f32.xlu0 %v64
    %v66 = vpop.xlane.xlu0 %65
    %v67 = vmax.f32 %v33, %v34
    %68 = vmax.xlane.f32.xlu0 %v67
    %v69 = vpop.xlane.xlu0 %68
    %v70 = vmax.f32 %v35, %v36
    %71 = vmax.xlane.f32.xlu0 %v70
    %v72 = vpop.xlane.xlu0 %71
    %v73 = vmax.f32 %v37, %v38
    %74 = vmax.xlane.f32.xlu0 %v73
    %v75 = vpop.xlane.xlu0 %74
    %v76 = vmax.f32 %v39, %v40
    %77 = vmax.xlane.f32.xlu0 %v76
    %v78 = vpop.xlane.xlu0 %77
    %v79 = vmax.f32 %v41, %v42
    %80 = vmax.xlane.f32.xlu0 %v79
    %v81 = vpop.xlane.xlu0 %80
    %v82 = vmax.f32 %v43, %v44
    %83 = vmax.xlane.f32.xlu0 %v82
    %v84 = vpop.xlane.xlu0 %83
    %v85 = vmax.f32 %v45, %v46
    %86 = vmax.xlane.f32.xlu0 %v85
    %v87 = vpop.xlane.xlu0 %86
    %v88 = vmax.f32 %v47, %v48
    %89 = vmax.xlane.f32.xlu0 %v88
    %v90 = vpop.xlane.xlu0 %89
    %v91 = vmax.f32 %v49, %v50
    %92 = vmax.xlane.f32.xlu0 %v91
    %v93 = vpop.xlane.xlu0 %92
    %v94 = vmax.f32 %v51, %v52
    %95 = vmax.xlane.f32.xlu0 %v94
    %v96 = vpop.xlane.xlu0 %95
    %v97 = vmax.f32 %v53, %v54
    %98 = vmax.xlane.f32.xlu0 %v97
    %v99 = vpop.xlane.xlu0 %98
    %v100 = vmax.f32 %v55, %v56
    %101 = vmax.xlane.f32.xlu0 %v100
    %v102 = vpop.xlane.xlu0 %101
    %v103 = vmax.f32 %v57, %v58
    %104 = vmax.xlane.f32.xlu0 %v103
    %v105 = vpop.xlane.xlu0 %104
    %v106 = vmax.f32 %v59, %v60
    %107 = vmax.xlane.f32.xlu0 %v106
    %v108 = vpop.xlane.xlu0 %107
    %v109 = vadd.f32 %v29, %v30
    %110 = vadd.xlane.f32.xlu0 %v109
    %v111 = vpop.xlane.xlu0 %110
    %v112 = vadd.f32 %v31, %v32
    %113 = vadd.xlane.f32.xlu0 %v112
    %v114 = vpop.xlane.xlu0 %113
    %v115 = vadd.f32 %v33, %v34
    %116 = vadd.xlane.f32.xlu0 %v115
    %v117 = vpop.xlane.xlu0 %116
    %v118 = vadd.f32 %v35, %v36
    %119 = vadd.xlane.f32.xlu0 %v118
    %v120 = vpop.xlane.xlu0 %119
    %v121 = vadd.f32 %v37, %v38
    %122 = vadd.xlane.f32.xlu0 %v121
    %v123 = vpop.xlane.xlu0 %122
    %v124 = vadd.f32 %v39, %v40
    %125 = vadd.xlane.f32.xlu0 %v124
    %v126 = vpop.xlane.xlu0 %125
    %v127 = vadd.f32 %v41, %v42
    %128 = vadd.xlane.f32.xlu0 %v127
    %v129 = vpop.xlane.xlu0 %128
    %v130 = vadd.f32 %v43, %v44
    %131 = vadd.xlane.f32.xlu0 %v130
    %v132 = vpop.xlane.xlu0 %131
    %v133 = vadd.f32 %v45, %v46
    %134 = vadd.xlane.f32.xlu0 %v133
    %v135 = vpop.xlane.xlu0 %134
    %v136 = vadd.f32 %v47, %v48
    %137 = vadd.xlane.f32.xlu0 %v136
    %v138 = vpop.xlane.xlu0 %137
    %v139 = vadd.f32 %v49, %v50
    %140 = vadd.xlane.f32.xlu0 %v139
    %v141 = vpop.xlane.xlu0 %140
    %v142 = vadd.f32 %v51, %v52
    %143 = vadd.xlane.f32.xlu0 %v142
    %v144 = vpop.xlane.xlu0 %143
    %v145 = vadd.f32 %v53, %v54
    %146 = vadd.xlane.f32.xlu0 %v145
    %v147 = vpop.xlane.xlu0 %146
    %v148 = vadd.f32 %v55, %v56
    %149 = vadd.xlane.f32.xlu0 %v148
    %v150 = vpop.xlane.xlu0 %149
    %v151 = vadd.f32 %v57, %v58
    %152 = vadd.xlane.f32.xlu0 %v151
    %v153 = vpop.xlane.xlu0 %152
    %v154 = vadd.f32 %v59, %v60
    %155 = vadd.xlane.f32.xlu0 %v154
    %v156 = vpop.xlane.xlu0 %155
    %p157 = scmp.eq.s32.totalorder 0, 0
    // Predicated region
    $region18: #{tpu_custom_call.1} parent=1 // pred_check
      %p158 = pneg %p157
    $region19: #{tpu_custom_call.1} parent=1 // pred_check_branch
      %160 = sbr.rel (%p158) target = $region21
    $region20: #{tpu_custom_call.1} parent=1 // pred_region
      %v177 = vlaneseq
      %v178 = vand.u32 %v177, 127
      %v179 = vlaneseq
      %v180 = vshrl.u32 %v179, 7
      %v181 = vsub.s32 %v178, %v180
      %v182 = vrot.slane %v63, %v181
      %v183 = vadd.s32 %v178, 4294967288
      %v184 = vlaneseq
      %v185 = vshrl.u32 %v184, 7
      %v186 = vsub.s32 %v183, %v185
      %v187 = vrot.slane %v66, %v186
      %vm188 = vcmask 130112
      %v189 = vsel %vm188, %v187, %v182
      %v190 = vadd.s32 %v178, 4294967280
      %v191 = vlaneseq
      %v192 = vshrl.u32 %v191, 7
      %v193 = vsub.s32 %v190, %v192
      %v194 = vrot.slane %v69, %v193
      %vm195 = vcmask 195712
      %v196 = vsel %vm195, %v194, %v189
      %v197 = vadd.s32 %v178, 4294967272
      %v198 = vlaneseq
      %v199 = vshrl.u32 %v198, 7
      %v200 = vsub.s32 %v197, %v199
      %v201 = vrot.slane %v72, %v200
      %vm202 = vcmask 261312
      %v203 = vsel %vm202, %v201, %v196
      %v204 = vadd.s32 %v178, 4294967264
      %v205 = vlaneseq
      %v206 = vshrl.u32 %v205, 7
      %v207 = vsub.s32 %v204, %v206
      %v208 = vrot.slane %v75, %v207
      %vm209 = vcmask 326912
      %v210 = vsel %vm209, %v208, %v203
      %v211 = vadd.s32 %v178, 4294967256
      %v212 = vlaneseq
      %v213 = vshrl.u32 %v212, 7
      %v214 = vsub.s32 %v211, %v213
      %v215 = vrot.slane %v78, %v214
      %vm216 = vcmask 392512
      %v217 = vsel %vm216, %v215, %v210
      %v218 = vadd.s32 %v178, 4294967248
      %v219 = vlaneseq
      %v220 = vshrl.u32 %v219, 7
      %v221 = vsub.s32 %v218, %v220
      %v222 = vrot.slane %v81, %v221
      %vm223 = vcmask 458112
      %v224 = vsel %vm223, %v222, %v217
      %v225 = vadd.s32 %v178, 4294967240
      %v226 = vlaneseq
      %v227 = vshrl.u32 %v226, 7
      %v228 = vsub.s32 %v225, %v227
      %v229 = vrot.slane %v84, %v228
      %vm230 = vcmask 523712
      %v231 = vsel %vm230, %v229, %v224
      %v232 = vlaneseq
      %v233 = vshrl.u32 %v232, 7
      %v234 = vsub.s32 %v178, %v233
      %v235 = vrot.slane %v87, %v234
      %v236 = vlaneseq
      %v237 = vshrl.u32 %v236, 7
      %v238 = vsub.s32 %v183, %v237
      %v239 = vrot.slane %v90, %v238
      %v240 = vsel %vm188, %v239, %v235
      %v241 = vlaneseq
      %v242 = vshrl.u32 %v241, 7
      %v243 = vsub.s32 %v190, %v242
      %v244 = vrot.slane %v93, %v243
      %v245 = vsel %vm195, %v244, %v240
      %v246 = vlaneseq
      %v247 = vshrl.u32 %v246, 7
      %v248 = vsub.s32 %v197, %v247
      %v249 = vrot.slane %v96, %v248
      %v250 = vsel %vm202, %v249, %v245
      %v251 = vlaneseq
      %v252 = vshrl.u32 %v251, 7
      %v253 = vsub.s32 %v204, %v252
      %v254 = vrot.slane %v99, %v253
      %v255 = vsel %vm209, %v254, %v250
      %v256 = vlaneseq
      %v257 = vshrl.u32 %v256, 7
      %v258 = vsub.s32 %v211, %v257
      %v259 = vrot.slane %v102, %v258
      %v260 = vsel %vm216, %v259, %v255
      %v261 = vlaneseq
      %v262 = vshrl.u32 %v261, 7
      %v263 = vsub.s32 %v218, %v262
      %v264 = vrot.slane %v105, %v263
      %v265 = vsel %vm223, %v264, %v260
      %v266 = vlaneseq
      %v267 = vshrl.u32 %v266, 7
      %v268 = vsub.s32 %v225, %v267
      %v269 = vrot.slane %v108, %v268
      %v270 = vsel %vm230, %v269, %v265
      %vm271 = vcmask 1041409
      %v272 = vsel %vm271, %v270, %v231
      %vm274 = vcmask 517120
      %275 = vst.msk [vmem:[#allocation2] sm:$0x3] %vm274, %v272
      %v292 = vlaneseq
      %v293 = vshrl.u32 %v292, 7
      %v294 = vsub.s32 %v178, %v293
      %v295 = vrot.slane %v111, %v294
      %v296 = vlaneseq
      %v297 = vshrl.u32 %v296, 7
      %v298 = vsub.s32 %v183, %v297
      %v299 = vrot.slane %v114, %v298
      %v300 = vsel %vm188, %v299, %v295
      %v301 = vlaneseq
      %v302 = vshrl.u32 %v301, 7
      %v303 = vsub.s32 %v190, %v302
      %v304 = vrot.slane %v117, %v303
      %v305 = vsel %vm195, %v304, %v300
      %v306 = vlaneseq
      %v307 = vshrl.u32 %v306, 7
      %v308 = vsub.s32 %v197, %v307
      %v309 = vrot.slane %v120, %v308
      %v310 = vsel %vm202, %v309, %v305
      %v311 = vlaneseq
      %v312 = vshrl.u32 %v311, 7
      %v313 = vsub.s32 %v204, %v312
      %v314 = vrot.slane %v123, %v313
      %v315 = vsel %vm209, %v314, %v310
      %v316 = vlaneseq
      %v317 = vshrl.u32 %v316, 7
      %v318 = vsub.s32 %v211, %v317
      %v319 = vrot.slane %v126, %v318
      %v320 = vsel %vm216, %v319, %v315
      %v321 = vlaneseq
      %v322 = vshrl.u32 %v321, 7
      %v323 = vsub.s32 %v218, %v322
      %v324 = vrot.slane %v129, %v323
      %v325 = vsel %vm223, %v324, %v320
      %v326 = vlaneseq
      %v327 = vshrl.u32 %v326, 7
      %v328 = vsub.s32 %v225, %v327
      %v329 = vrot.slane %v132, %v328
      %v330 = vsel %vm230, %v329, %v325
      %v331 = vlaneseq
      %v332 = vshrl.u32 %v331, 7
      %v333 = vsub.s32 %v178, %v332
      %v334 = vrot.slane %v135, %v333
      %v335 = vlaneseq
      %v336 = vshrl.u32 %v335, 7
      %v337 = vsub.s32 %v183, %v336
      %v338 = vrot.slane %v138, %v337
      %v339 = vsel %vm188, %v338, %v334
      %v340 = vlaneseq
      %v341 = vshrl.u32 %v340, 7
      %v342 = vsub.s32 %v190, %v341
      %v343 = vrot.slane %v141, %v342
      %v344 = vsel %vm195, %v343, %v339
      %v345 = vlaneseq
      %v346 = vshrl.u32 %v345, 7
      %v347 = vsub.s32 %v197, %v346
      %v348 = vrot.slane %v144, %v347
      %v349 = vsel %vm202, %v348, %v344
      %v350 = vlaneseq
      %v351 = vshrl.u32 %v350, 7
      %v352 = vsub.s32 %v204, %v351
      %v353 = vrot.slane %v147, %v352
      %v354 = vsel %vm209, %v353, %v349
      %v355 = vlaneseq
      %v356 = vshrl.u32 %v355, 7
      %v357 = vsub.s32 %v211, %v356
      %v358 = vrot.slane %v150, %v357
      %v359 = vsel %vm216, %v358, %v354
      %v360 = vlaneseq
      %v361 = vshrl.u32 %v360, 7
      %v362 = vsub.s32 %v218, %v361
      %v363 = vrot.slane %v153, %v362
      %v364 = vsel %vm223, %v363, %v359
      %v365 = vlaneseq
      %v366 = vshrl.u32 %v365, 7
      %v367 = vsub.s32 %v225, %v366
      %v368 = vrot.slane %v156, %v367
      %v369 = vsel %vm230, %v368, %v364
      %v370 = vsel %vm271, %v369, %v330
      %372 = vst.msk [vmem:[#allocation3] sm:$0x3] %vm274, %v370
    $region21: #{tpu_custom_call.1} parent=1 // pred_fallthru
      _
    %p373 = scmp.ne.s32.totalorder 0, 0
    // Predicated region
    $region22: #{tpu_custom_call.1} parent=1 // pred_check
      %p374 = pneg %p373
    $region23: #{tpu_custom_call.1} parent=1 // pred_check_branch
      %376 = sbr.rel (%p374) target = $region25
    $region24: #{tpu_custom_call.1} parent=1 // pred_region
      %v377 = vld [vmem:[#allocation2] sm:$0x3]
      %v394 = vlaneseq
      %v395 = vand.u32 %v394, 127
      %v396 = vlaneseq
      %v397 = vshrl.u32 %v396, 7
      %v398 = vsub.s32 %v395, %v397
      %v399 = vrot.slane %v63, %v398
      %v400 = vadd.s32 %v395, 4294967288
      %v401 = vlaneseq
      %v402 = vshrl.u32 %v401, 7
      %v403 = vsub.s32 %v400, %v402
      %v404 = vrot.slane %v66, %v403
      %vm405 = vcmask 130112
      %v406 = vsel %vm405, %v404, %v399
      %v407 = vadd.s32 %v395, 4294967280
      %v408 = vlaneseq
      %v409 = vshrl.u32 %v408, 7
      %v410 = vsub.s32 %v407, %v409
      %v411 = vrot.slane %v69, %v410
      %vm412 = vcmask 195712
      %v413 = vsel %vm412, %v411, %v406
      %v414 = vadd.s32 %v395, 4294967272
      %v415 = vlaneseq
      %v416 = vshrl.u32 %v415, 7
      %v417 = vsub.s32 %v414, %v416
      %v418 = vrot.slane %v72, %v417
      %vm419 = vcmask 261312
      %v420 = vsel %vm419, %v418, %v413
      %v421 = vadd.s32 %v395, 4294967264
      %v422 = vlaneseq
      %v423 = vshrl.u32 %v422, 7
      %v424 = vsub.s32 %v421, %v423
      %v425 = vrot.slane %v75, %v424
      %vm426 = vcmask 326912
      %v427 = vsel %vm426, %v425, %v420
      %v428 = vadd.s32 %v395, 4294967256
      %v429 = vlaneseq
      %v430 = vshrl.u32 %v429, 7
      %v431 = vsub.s32 %v428, %v430
      %v432 = vrot.slane %v78, %v431
      %vm433 = vcmask 392512
      %v434 = vsel %vm433, %v432, %v427
      %v435 = vadd.s32 %v395, 4294967248
      %v436 = vlaneseq
      %v437 = vshrl.u32 %v436, 7
      %v438 = vsub.s32 %v435, %v437
      %v439 = vrot.slane %v81, %v438
      %vm440 = vcmask 458112
      %v441 = vsel %vm440, %v439, %v434
      %v442 = vadd.s32 %v395, 4294967240
      %v443 = vlaneseq
      %v444 = vshrl.u32 %v443, 7
      %v445 = vsub.s32 %v442, %v444
      %v446 = vrot.slane %v84, %v445
      %vm447 = vcmask 523712
      %v448 = vsel %vm447, %v446, %v441
      %v449 = vlaneseq
      %v450 = vshrl.u32 %v449, 7
      %v451 = vsub.s32 %v395, %v450
      %v452 = vrot.slane %v87, %v451
      %v453 = vlaneseq
      %v454 = vshrl.u32 %v453, 7
      %v455 = vsub.s32 %v400, %v454
      %v456 = vrot.slane %v90, %v455
      %v457 = vsel %vm405, %v456, %v452
      %v458 = vlaneseq
      %v459 = vshrl.u32 %v458, 7
      %v460 = vsub.s32 %v407, %v459
      %v461 = vrot.slane %v93, %v460
      %v462 = vsel %vm412, %v461, %v457
      %v463 = vlaneseq
      %v464 = vshrl.u32 %v463, 7
      %v465 = vsub.s32 %v414, %v464
      %v466 = vrot.slane %v96, %v465
      %v467 = vsel %vm419, %v466, %v462
      %v468 = vlaneseq
      %v469 = vshrl.u32 %v468, 7
      %v470 = vsub.s32 %v421, %v469
      %v471 = vrot.slane %v99, %v470
      %v472 = vsel %vm426, %v471, %v467
      %v473 = vlaneseq
      %v474 = vshrl.u32 %v473, 7
      %v475 = vsub.s32 %v428, %v474
      %v476 = vrot.slane %v102, %v475
      %v477 = vsel %vm433, %v476, %v472
      %v478 = vlaneseq
      %v479 = vshrl.u32 %v478, 7
      %v480 = vsub.s32 %v435, %v479
      %v481 = vrot.slane %v105, %v480
      %v482 = vsel %vm440, %v481, %v477
      %v483 = vlaneseq
      %v484 = vshrl.u32 %v483, 7
      %v485 = vsub.s32 %v442, %v484
      %v486 = vrot.slane %v108, %v485
      %v487 = vsel %vm447, %v486, %v482
      %vm488 = vcmask 1041409
      %v489 = vsel %vm488, %v487, %v448
      %v491 = vmax.f32 %v377, %v489
      %vm492 = vcmask 517120
      %493 = vst.msk [vmem:[#allocation2] sm:$0x3] %vm492, %v491
      %v494 = vld [vmem:[#allocation3] sm:$0x3]
      %v511 = vlaneseq
      %v512 = vshrl.u32 %v511, 7
      %v513 = vsub.s32 %v395, %v512
      %v514 = vrot.slane %v111, %v513
      %v515 = vlaneseq
      %v516 = vshrl.u32 %v515, 7
      %v517 = vsub.s32 %v400, %v516
      %v518 = vrot.slane %v114, %v517
      %v519 = vsel %vm405, %v518, %v514
      %v520 = vlaneseq
      %v521 = vshrl.u32 %v520, 7
      %v522 = vsub.s32 %v407, %v521
      %v523 = vrot.slane %v117, %v522
      %v524 = vsel %vm412, %v523, %v519
      %v525 = vlaneseq
      %v526 = vshrl.u32 %v525, 7
      %v527 = vsub.s32 %v414, %v526
      %v528 = vrot.slane %v120, %v527
      %v529 = vsel %vm419, %v528, %v524
      %v530 = vlaneseq
      %v531 = vshrl.u32 %v530, 7
      %v532 = vsub.s32 %v421, %v531
      %v533 = vrot.slane %v123, %v532
      %v534 = vsel %vm426, %v533, %v529
      %v535 = vlaneseq
      %v536 = vshrl.u32 %v535, 7
      %v537 = vsub.s32 %v428, %v536
      %v538 = vrot.slane %v126, %v537
      %v539 = vsel %vm433, %v538, %v534
      %v540 = vlaneseq
      %v541 = vshrl.u32 %v540, 7
      %v542 = vsub.s32 %v435, %v541
      %v543 = vrot.slane %v129, %v542
      %v544 = vsel %vm440, %v543, %v539
      %v545 = vlaneseq
      %v546 = vshrl.u32 %v545, 7
      %v547 = vsub.s32 %v442, %v546
      %v548 = vrot.slane %v132, %v547
      %v549 = vsel %vm447, %v548, %v544
      %v550 = vlaneseq
      %v551 = vshrl.u32 %v550, 7
      %v552 = vsub.s32 %v395, %v551
      %v553 = vrot.slane %v135, %v552
      %v554 = vlaneseq
      %v555 = vshrl.u32 %v554, 7
      %v556 = vsub.s32 %v400, %v555
      %v557 = vrot.slane %v138, %v556
      %v558 = vsel %vm405, %v557, %v553
      %v559 = vlaneseq
      %v560 = vshrl.u32 %v559, 7
      %v561 = vsub.s32 %v407, %v560
      %v562 = vrot.slane %v141, %v561
      %v563 = vsel %vm412, %v562, %v558
      %v564 = vlaneseq
      %v565 = vshrl.u32 %v564, 7
      %v566 = vsub.s32 %v414, %v565
      %v567 = vrot.slane %v144, %v566
      %v568 = vsel %vm419, %v567, %v563
      %v569 = vlaneseq
      %v570 = vshrl.u32 %v569, 7
      %v571 = vsub.s32 %v421, %v570
      %v572 = vrot.slane %v147, %v571
      %v573 = vsel %vm426, %v572, %v568
      %v574 = vlaneseq
      %v575 = vshrl.u32 %v574, 7
      %v576 = vsub.s32 %v428, %v575
      %v577 = vrot.slane %v150, %v576
      %v578 = vsel %vm433, %v577, %v573
      %v579 = vlaneseq
      %v580 = vshrl.u32 %v579, 7
      %v581 = vsub.s32 %v435, %v580
      %v582 = vrot.slane %v153, %v581
      %v583 = vsel %vm440, %v582, %v578
      %v584 = vlaneseq
      %v585 = vshrl.u32 %v584, 7
      %v586 = vsub.s32 %v442, %v585
      %v587 = vrot.slane %v156, %v586
      %v588 = vsel %vm447, %v587, %v583
      %v589 = vsel %vm488, %v588, %v549
      %v591 = vadd.f32 %v494, %v589
      %592 = vst.msk [vmem:[#allocation3] sm:$0x3] %vm492, %v591
    $region25: #{tpu_custom_call.1} parent=1 // pred_fallthru
      _
    // Predicated region
    $region26: #{tpu_custom_call.1} parent=1 // pred_check
      %p593 = pneg %p157
    $region27: #{tpu_custom_call.1} parent=1 // pred_check_branch
      %595 = sbr.rel (%p593) target = $region29
    $region28: #{tpu_custom_call.1} parent=1 // pred_region
      %v596 = vld [vmem:[%s1] sm:$0xff]
      %v597 = vld [vmem:[%s1 + $0x8] sm:$0xff]
      %v598 = vld [vmem:[%s1 + $0x10] sm:$0xff]
      %v599 = vld [vmem:[%s1 + $0x18] sm:$0xff]
      %v600 = vld [vmem:[%s1 + $0x20] sm:$0xff]
      %v601 = vld [vmem:[%s1 + $0x28] sm:$0xff]
      %v602 = vld [vmem:[%s1 + $0x30] sm:$0xff]
      %v603 = vld [vmem:[%s1 + $0x38] sm:$0xff]
      %v604 = vld [vmem:[%s2] sm:$0xf]
      %v605 = vld [vmem:[#allocation3] sm:$0x3]
      %v606 = vmul.f32 %v605, 0.00390625
      %v607 = vld [vmem:[#allocation2] sm:$0x3]
      %vm608 = vcmask 523264
      %v610 = vsel %vm608, %v606, 0
      %612 = vmatprep.subr.mxu0 0.0
      %613 = vmatpush1.msra.mxu0 %v596
      %614 = vmatprep.subr.mxu0 0.0
      %615 = vmatpush1.msra.mxu0 %v597
      %616 = vmatprep.subr.mxu0 0.0
      %617 = vmatpush1.msra.mxu0 %v598
      %618 = vmatprep.subr.mxu0 0.0
      %619 = vmatpush1.msra.mxu0 %v599
      %620 = vmatprep.subr.mxu0 0.0
      %621 = vmatpush1.msra.mxu0 %v600
      %622 = vmatprep.subr.mxu0 0.0
      %623 = vmatpush1.msra.mxu0 %v601
      %624 = vmatprep.subr.mxu0 0.0
      %625 = vmatpush1.msra.mxu0 %v602
      %626 = vmatprep.subr.mxu0 0.0
      %627 = vmatpush1.msra.mxu0 %v603
      %628 = vmatprep.subr.mxu0 0.0
      %629 = vmatpush1.msra.mxu0 0.0
      %630 = vmatprep.subr.mxu0 0.0
      %631 = vmatpush1.msra.mxu0 0.0
      %632 = vmatprep.subr.mxu0 0.0
      %633 = vmatpush1.msra.mxu0 0.0
      %634 = vmatprep.subr.mxu0 0.0
      %635 = vmatpush1.msra.mxu0 0.0
      %636 = vmatprep.subr.mxu0 0.0
      %637 = vmatpush1.msra.mxu0 0.0
      %638 = vmatprep.subr.mxu0 0.0
      %639 = vmatpush1.msra.mxu0 0.0
      %640 = vmatprep.subr.mxu0 0.0
      %641 = vmatpush1.msra.mxu0 0.0
      %642 = vmatprep.subr.mxu0 0.0
      %643 = vmatpush1.msra.mxu0 0.0
      %644 = vmatprep.subr.mxu0 0.0
      %645 = vmatpush1.msra.mxu0 0.0
      %646 = vmatprep.subr.mxu0 0.0
      %647 = vmatpush1.msra.mxu0 0.0
      %648 = vmatprep.subr.mxu0 0.0
      %649 = vmatpush1.msra.mxu0 0.0
      %650 = vmatprep.subr.mxu0 0.0
      %651 = vmatpush1.msra.mxu0 0.0
      %652 = vmatprep.subr.mxu0 0.0
      %653 = vmatpush1.msra.mxu0 0.0
      %654 = vmatprep.subr.mxu0 0.0
      %655 = vmatpush1.msra.mxu0 0.0
      %656 = vmatprep.subr.mxu0 0.0
      %657 = vmatpush1.msra.mxu0 0.0
      %658 = vmatprep.subr.mxu0 0.0
      %659 = vmatpush1.msra.mxu0 0.0
      %660 = vmatprep.subr.mxu0 0.0
      %661 = vmatpush1.msra.mxu0 0.0
      %662 = vmatprep.subr.mxu0 0.0
      %663 = vmatpush1.msra.mxu0 0.0
      %664 = vmatprep.subr.mxu0 0.0
      %665 = vmatpush1.msra.mxu0 0.0
      %666 = vmatprep.subr.mxu0 0.0
      %667 = vmatpush1.msra.mxu0 0.0
      %668 = vmatprep.subr.mxu0 0.0
      %669 = vmatpush1.msra.mxu0 0.0
      %670 = vmatprep.subr.mxu0 0.0
      %671 = vmatpush1.msra.mxu0 0.0
      %672 = vmatprep.subr.mxu0 0.0
      %673 = vmatpush1.msra.mxu0 0.0
      %674 = vmatprep.subr.mxu0 0.0
      %675 = vmatpush1.msra.mxu0 0.0
      %676 = vmatprep.mubr.f32.mxu0 0.0
      %677 = vmatmul.mubr.f32.gmra.mrb[0].mxu0 %v610
      %v678 = vpop.f32.mrb[0].mxu0
      %v679 = vadd.f32 0.0, %v678
      %v680 = vpop.f32.mrb[0].mxu0
      %681 = vdwg.mxu0
      %v682 = vmax.f32 %v679, 0.0
      %v684 = vsel %vm608, %v607, 0
      %686 = vmatprep.subr.mxu0 0.0
      %687 = vmatpush1.msra.mxu0 %v596
      %688 = vmatprep.subr.mxu0 0.0
      %689 = vmatpush1.msra.mxu0 %v597
      %690 = vmatprep.subr.mxu0 0.0
      %691 = vmatpush1.msra.mxu0 %v598
      %692 = vmatprep.subr.mxu0 0.0
      %693 = vmatpush1.msra.mxu0 %v599
      %694 = vmatprep.subr.mxu0 0.0
      %695 = vmatpush1.msra.mxu0 %v600
      %696 = vmatprep.subr.mxu0 0.0
      %697 = vmatpush1.msra.mxu0 %v601
      %698 = vmatprep.subr.mxu0 0.0
      %699 = vmatpush1.msra.mxu0 %v602
      %700 = vmatprep.subr.mxu0 0.0
      %701 = vmatpush1.msra.mxu0 %v603
      %702 = vmatprep.subr.mxu0 0.0
      %703 = vmatpush1.msra.mxu0 0.0
      %704 = vmatprep.subr.mxu0 0.0
      %705 = vmatpush1.msra.mxu0 0.0
      %706 = vmatprep.subr.mxu0 0.0
      %707 = vmatpush1.msra.mxu0 0.0
      %708 = vmatprep.subr.mxu0 0.0
      %709 = vmatpush1.msra.mxu0 0.0
      %710 = vmatprep.subr.mxu0 0.0
      %711 = vmatpush1.msra.mxu0 0.0
      %712 = vmatprep.subr.mxu0 0.0
      %713 = vmatpush1.msra.mxu0 0.0
      %714 = vmatprep.subr.mxu0 0.0
      %715 = vmatpush1.msra.mxu0 0.0
      %716 = vmatprep.subr.mxu0 0.0
      %717 = vmatpush1.msra.mxu0 0.0
      %718 = vmatprep.subr.mxu0 0.0
      %719 = vmatpush1.msra.mxu0 0.0
      %720 = vmatprep.subr.mxu0 0.0
      %721 = vmatpush1.msra.mxu0 0.0
      %722 = vmatprep.subr.mxu0 0.0
      %723 = vmatpush1.msra.mxu0 0.0
      %724 = vmatprep.subr.mxu0 0.0
      %725 = vmatpush1.msra.mxu0 0.0
      %726 = vmatprep.subr.mxu0 0.0
      %727 = vmatpush1.msra.mxu0 0.0
      %728 = vmatprep.subr.mxu0 0.0
      %729 = vmatpush1.msra.mxu0 0.0
      %730 = vmatprep.subr.mxu0 0.0
      %731 = vmatpush1.msra.mxu0 0.0
      %732 = vmatprep.subr.mxu0 0.0
      %733 = vmatpush1.msra.mxu0 0.0
      %734 = vmatprep.subr.mxu0 0.0
      %735 = vmatpush1.msra.mxu0 0.0
      %736 = vmatprep.subr.mxu0 0.0
      %737 = vmatpush1.msra.mxu0 0.0
      %738 = vmatprep.subr.mxu0 0.0
      %739 = vmatpush1.msra.mxu0 0.0
      %740 = vmatprep.subr.mxu0 0.0
      %741 = vmatpush1.msra.mxu0 0.0
      %742 = vmatprep.subr.mxu0 0.0
      %743 = vmatpush1.msra.mxu0 0.0
      %744 = vmatprep.subr.mxu0 0.0
      %745 = vmatpush1.msra.mxu0 0.0
      %746 = vmatprep.subr.mxu0 0.0
      %747 = vmatpush1.msra.mxu0 0.0
      %748 = vmatprep.subr.mxu0 0.0
      %749 = vmatpush1.msra.mxu0 0.0
      %750 = vmatprep.mubr.f32.mxu0 0.0
      %751 = vmatmul.mubr.f32.gmra.mrb[0].mxu0 %v684
      %v752 = vpop.f32.mrb[0].mxu0
      %v753 = vadd.f32 0.0, %v752
      %v754 = vpop.f32.mrb[0].mxu0
      %755 = vdwg.mxu0
      %v756 = vmax.f32 %v753, 0.0
      %vm757 = vcmask 31744
      %v759 = vsel %vm757, %v756, 0
      %vm761 = vcmask 1043456
      %v763 = vsel %vm761, %v604, 0
      %765 = vmatprep.subr.mxu0 0.0
      %766 = vmatpush1.msra.mxu0 %v763
      %767 = vmatprep.subr.mxu0 0.0
      %768 = vmatpush1.msra.mxu0 0.0
      %769 = vmatprep.subr.mxu0 0.0
      %770 = vmatpush1.msra.mxu0 0.0
      %771 = vmatprep.subr.mxu0 0.0
      %772 = vmatpush1.msra.mxu0 0.0
      %773 = vmatprep.subr.mxu0 0.0
      %774 = vmatpush1.msra.mxu0 0.0
      %775 = vmatprep.subr.mxu0 0.0
      %776 = vmatpush1.msra.mxu0 0.0
      %777 = vmatprep.subr.mxu0 0.0
      %778 = vmatpush1.msra.mxu0 0.0
      %779 = vmatprep.subr.mxu0 0.0
      %780 = vmatpush1.msra.mxu0 0.0
      %781 = vmatprep.subr.mxu0 0.0
      %782 = vmatpush1.msra.mxu0 0.0
      %783 = vmatprep.subr.mxu0 0.0
      %784 = vmatpush1.msra.mxu0 0.0
      %785 = vmatprep.subr.mxu0 0.0
      %786 = vmatpush1.msra.mxu0 0.0
      %787 = vmatprep.subr.mxu0 0.0
      %788 = vmatpush1.msra.mxu0 0.0
      %789 = vmatprep.subr.mxu0 0.0
      %790 = vmatpush1.msra.mxu0 0.0
      %791 = vmatprep.subr.mxu0 0.0
      %792 = vmatpush1.msra.mxu0 0.0
      %793 = vmatprep.subr.mxu0 0.0
      %794 = vmatpush1.msra.mxu0 0.0
      %795 = vmatprep.subr.mxu0 0.0
      %796 = vmatpush1.msra.mxu0 0.0
      %797 = vmatprep.subr.mxu0 0.0
      %798 = vmatpush1.msra.mxu0 0.0
      %799 = vmatprep.subr.mxu0 0.0
      %800 = vmatpush1.msra.mxu0 0.0
      %801 = vmatprep.subr.mxu0 0.0
      %802 = vmatpush1.msra.mxu0 0.0
      %803 = vmatprep.subr.mxu0 0.0
      %804 = vmatpush1.msra.mxu0 0.0
      %805 = vmatprep.subr.mxu0 0.0
      %806 = vmatpush1.msra.mxu0 0.0
      %807 = vmatprep.subr.mxu0 0.0
      %808 = vmatpush1.msra.mxu0 0.0
      %809 = vmatprep.subr.mxu0 0.0
      %810 = vmatpush1.msra.mxu0 0.0
      %811 = vmatprep.subr.mxu0 0.0
      %812 = vmatpush1.msra.mxu0 0.0
      %813 = vmatprep.subr.mxu0 0.0
      %814 = vmatpush1.msra.mxu0 0.0
      %815 = vmatprep.subr.mxu0 0.0
      %816 = vmatpush1.msra.mxu0 0.0
      %817 = vmatprep.subr.mxu0 0.0
      %818 = vmatpush1.msra.mxu0 0.0
      %819 = vmatprep.subr.mxu0 0.0
      %820 = vmatpush1.msra.mxu0 0.0
      %821 = vmatprep.subr.mxu0 0.0
      %822 = vmatpush1.msra.mxu0 0.0
      %823 = vmatprep.subr.mxu0 0.0
      %824 = vmatpush1.msra.mxu0 0.0
      %825 = vmatprep.subr.mxu0 0.0
      %826 = vmatpush1.msra.mxu0 0.0
      %827 = vmatprep.subr.mxu0 0.0
      %828 = vmatpush1.msra.mxu0 0.0
      %829 = vmatprep.mubr.f32.mxu0 0.0
      %830 = vmatmul.mubr.f32.gmra.mrb[0].mxu0 %v759
      %v831 = vpop.f32.mrb[0].mxu0
      %v832 = vadd.f32 0.0, %v831
      %v833 = vpop.f32.mrb[0].mxu0
      %834 = vdwg.mxu0
      %v836 = vsel %vm757, %v682, 0
      %838 = vmatprep.subr.mxu0 0.0
      %839 = vmatpush1.msra.mxu0 %v763
      %840 = vmatprep.subr.mxu0 0.0
      %841 = vmatpush1.msra.mxu0 0.0
      %842 = vmatprep.subr.mxu0 0.0
      %843 = vmatpush1.msra.mxu0 0.0
      %844 = vmatprep.subr.mxu0 0.0
      %845 = vmatpush1.msra.mxu0 0.0
      %846 = vmatprep.subr.mxu0 0.0
      %847 = vmatpush1.msra.mxu0 0.0
      %848 = vmatprep.subr.mxu0 0.0
      %849 = vmatpush1.msra.mxu0 0.0
      %850 = vmatprep.subr.mxu0 0.0
      %851 = vmatpush1.msra.mxu0 0.0
      %852 = vmatprep.subr.mxu0 0.0
      %853 = vmatpush1.msra.mxu0 0.0
      %854 = vmatprep.subr.mxu0 0.0
      %855 = vmatpush1.msra.mxu0 0.0
      %856 = vmatprep.subr.mxu0 0.0
      %857 = vmatpush1.msra.mxu0 0.0
      %858 = vmatprep.subr.mxu0 0.0
      %859 = vmatpush1.msra.mxu0 0.0
      %860 = vmatprep.subr.mxu0 0.0
      %861 = vmatpush1.msra.mxu0 0.0
      %862 = vmatprep.subr.mxu0 0.0
      %863 = vmatpush1.msra.mxu0 0.0
      %864 = vmatprep.subr.mxu0 0.0
      %865 = vmatpush1.msra.mxu0 0.0
      %866 = vmatprep.subr.mxu0 0.0
      %867 = vmatpush1.msra.mxu0 0.0
      %868 = vmatprep.subr.mxu0 0.0
      %869 = vmatpush1.msra.mxu0 0.0
      %870 = vmatprep.subr.mxu0 0.0
      %871 = vmatpush1.msra.mxu0 0.0
      %872 = vmatprep.subr.mxu0 0.0
      %873 = vmatpush1.msra.mxu0 0.0
      %874 = vmatprep.subr.mxu0 0.0
      %875 = vmatpush1.msra.mxu0 0.0
      %876 = vmatprep.subr.mxu0 0.0
      %877 = vmatpush1.msra.mxu0 0.0
      %878 = vmatprep.subr.mxu0 0.0
      %879 = vmatpush1.msra.mxu0 0.0
      %880 = vmatprep.subr.mxu0 0.0
      %881 = vmatpush1.msra.mxu0 0.0
      %882 = vmatprep.subr.mxu0 0.0
      %883 = vmatpush1.msra.mxu0 0.0
      %884 = vmatprep.subr.mxu0 0.0
      %885 = vmatpush1.msra.mxu0 0.0
      %886 = vmatprep.subr.mxu0 0.0
      %887 = vmatpush1.msra.mxu0 0.0
      %888 = vmatprep.subr.mxu0 0.0
      %889 = vmatpush1.msra.mxu0 0.0
      %890 = vmatprep.subr.mxu0 0.0
      %891 = vmatpush1.msra.mxu0 0.0
      %892 = vmatprep.subr.mxu0 0.0
      %893 = vmatpush1.msra.mxu0 0.0
      %894 = vmatprep.subr.mxu0 0.0
      %895 = vmatpush1.msra.mxu0 0.0
      %896 = vmatprep.subr.mxu0 0.0
      %897 = vmatpush1.msra.mxu0 0.0
      %898 = vmatprep.subr.mxu0 0.0
      %899 = vmatpush1.msra.mxu0 0.0
      %900 = vmatprep.subr.mxu0 0.0
      %901 = vmatpush1.msra.mxu0 0.0
      %902 = vmatprep.mubr.f32.mxu0 0.0
      %903 = vmatmul.mubr.f32.gmra.mrb[0].mxu0 %v836
      %v904 = vpop.f32.mrb[0].mxu0
      %v905 = vadd.f32 %v832, %v904
      %v906 = vpop.f32.mrb[0].mxu0
      %907 = vdwg.mxu0
      %v908 = vxor.u32 %v905, 2147483648
      %v909 = vmul.f32 %v908, 1.442695
      %v910 = vpow.pop %v909
      %v911 = vadd.f32 %v910, 1.0
      %v912 = vrcp.pop %v911
      %v913 = vmul.f32 1.0, %v912
      %vm914 = vcmask 517120
      %915 = vst.msk [vmem:[#allocation7] sm:$0x3] %vm914, %v913
    $region29: #{tpu_custom_call.1} parent=1 // pred_fallthru
      _
    // Predicated region
    $region30: #{tpu_custom_call.1} parent=1 // pred_check
      _
    $region31: #{tpu_custom_call.1} parent=1 // pred_check_branch
      %917 = sbr.rel (0) target = $region33
    $region32: #{tpu_custom_call.1} parent=1 // pred_region
      %s919 = ssub.s32 32, 32
      %920 = vsyncadd [#allocation6], %s919
      %s922 = sshll.u32 [#allocation7], 4
      %s923 = int_to_ptr.vmem [resolvable:$true] %s922
      %925 = dma.vmem_to_hbm [thread:$0]  %s923, 32, %s3, [#allocation6]
    $region33: #{tpu_custom_call.1} parent=1 // pred_fallthru
      _
    // Predicated region
    $region34: #{tpu_custom_call.1} parent=1 // pred_check
      _
    $region35: #{tpu_custom_call.1} parent=1 // pred_check_branch
      %927 = sbr.rel (0) target = $region37
    $region36: #{tpu_custom_call.1} parent=1 // pred_region
      %928 = dma.done [#allocation6], 32
    $region37: #{tpu_custom_call.1} parent=1 // pred_fallthru
      _
    %929 = vsyncpa [#allocation5], 1
    %930 = vsyncpa [#allocation6], 1

</llo_original>
